<compile_context>
chip_gen: v5e
topology: v5e:2x2
jax: 0.10.0
libtpu: 0.0.40
codegen_flags: <defaults>
</compile_context>

<pallas_src>
import jax
import jax.numpy as jnp
import numpy as np
from jax.experimental import pallas as pl
from jax.experimental.pallas import tpu as pltpu


def _make_kernel(*, layers, ksize, T, F):
    """Per-batch kernel.  Ref shapes:
       h0 (1,T,F) bf16, mask (1,T,1) f32,
       wd (L,K*F,F) bf16, bd (L,1,F) f32, wp (L,F,F) bf16, bp (L,1,F) f32,
       wo (F,Cpad) bf16, bo (1,Cpad) f32   ->   out (1,T,Cpad) f32."""
    center = (ksize - 1) // 2

    def kernel(h0_ref, m_ref, wd_ref, bd_ref, wp_ref, bp_ref, wo_ref, bo_ref,
               out_ref, h_scr):
        m = m_ref[0]                                        # (T, 1) f32
        h_scr[...] = h0_ref[0].astype(jnp.float32)          # residual stream, f32
        row = jax.lax.broadcasted_iota(jnp.int32, (T, F), 0)  # hoisted once

        def shifted_tap(h, s):
            """h[t + s] with zero fill for out-of-range t + s; s is a Python int."""
            if s == 0:
                return h
            if abs(s) >= T:
                return jnp.zeros_like(h)
            rolled = pltpu.roll(h, shift=(-s) % T, axis=0)  # XLU sublane roll
            valid = jnp.logical_and(row + s >= 0, row + s < T)
            return jnp.where(valid, rolled, 0.0)

        # Fully unrolled layer loop: dilation 4**l and all shifts are static.
        for l in range(layers):
            dil = 4 ** l
            h = h_scr[...]                                  # (T, F) f32
            # Contraction-side tap fusion: one (T, K*F) x (K*F, F) MXU matmul.
            x_kf = jnp.concatenate(
                [shifted_tap(h, (k - center) * dil).astype(jnp.bfloat16)
                 for k in range(ksize)], axis=1)            # (T, K*F) bf16
            y = jnp.dot(x_kf, wd_ref[l],
                        preferred_element_type=jnp.float32) + bd_ref[l]
            r = jnp.maximum(y, 0.0)                         # ReLU
            o = jnp.dot(r.astype(jnp.bfloat16), wp_ref[l],
                        preferred_element_type=jnp.float32) + bp_ref[l]
            # TODO(synk): nn.Dropout() is identity here (inference semantics).
            h_scr[...] = (h + o) * m                        # residual + mask

        logits = jnp.dot(h_scr[...].astype(jnp.bfloat16), wo_ref[...],
                         preferred_element_type=jnp.float32) + bo_ref[...]
        out_ref[0] = logits * m                             # lane-dense store

    return kernel


def _vmem_limit_bytes(T, F, Cpad, layers, ksize):
    """Explicit scoped-VMEM budget (double-buffered IO blocks + weights +
    scratch + per-layer transients), with headroom; clamped to v7x's 64 MiB."""
    io = 2 * (T * F * 2            # h0 bf16 block
              + T * 1 * 4          # mask block
              + T * Cpad * 4)      # output block
    wts = 2 * (layers * ksize * F * F * 2 + layers * F * 4
               + layers * F * F * 2 + layers * F * 4
               + F * Cpad * 2 + Cpad * 4)
    scratch = T * F * 4                                   # residual stream
    transient = T * ksize * F * (4 + 2) + 2 * T * F * 4   # rolled taps + y/o
    need = io + wts + scratch + transient
    return int(min(max(2 * need, 16 << 20), 64 << 20))


def single_stage_forward(x_nct, mask_nct, params, *, layers, ksize):
    """x_nct: (B, dim, T) f32, mask_nct: (B, C>=1, T) f32 -> (B, num_classes, T)."""
    B, Cin, T = x_nct.shape
    F = params["w0"].shape[1]
    Cout = params["wo"].shape[1]
    Cpad = max(128, ((Cout + 127) // 128) * 128)          # lane-dense output width

    # Input 1x1 conv (dim -> F) as a plain XLA matmul; DMA h0 to the kernel in
    # bf16 (it feeds the bf16 MXU on layer 0 anyway).
    h0 = (jnp.einsum("bct,cf->btf", x_nct, params["w0"]) + params["b0"]
          ).astype(jnp.bfloat16)
    m_bt1 = jnp.transpose(mask_nct[:, 0:1, :], (0, 2, 1)).astype(jnp.float32)

    # Pack the K dilated-conv taps along the CONTRACTION axis:
    # (L, K, F_in, F_out) -> (L, K*F_in, F_out).
    wd_packed = params["wd"].reshape(layers, ksize * F, F).astype(jnp.bfloat16)
    bd = params["bd"][:, None, :].astype(jnp.float32)     # (L, 1, F)
    wp = params["wp"].astype(jnp.bfloat16)                # (L, F, F)
    bp = params["bp"][:, None, :].astype(jnp.float32)     # (L, 1, F)
    wo = jnp.pad(params["wo"], ((0, 0), (0, Cpad - Cout))).astype(jnp.bfloat16)
    bo = jnp.pad(params["bo"], ((0, 0), (0, Cpad - Cout))).astype(jnp.float32)

    kernel = _make_kernel(layers=layers, ksize=ksize, T=T, F=F)

    def const_spec(shape):
        return pl.BlockSpec(shape, lambda b, _n=len(shape): (0,) * _n)

    out_btc = pl.pallas_call(
        kernel,
        out_shape=jax.ShapeDtypeStruct((B, T, Cpad), jnp.float32),
        grid=(B,),
        in_specs=[
            pl.BlockSpec((1, T, F), lambda b: (b, 0, 0)),         # h0 (bf16)
            pl.BlockSpec((1, T, 1), lambda b: (b, 0, 0)),         # mask column
            const_spec(wd_packed.shape),
            const_spec(bd.shape),
            const_spec(wp.shape),
            const_spec(bp.shape),
            const_spec(wo.shape),
            const_spec(bo.shape),
        ],
        out_specs=pl.BlockSpec((1, T, Cpad), lambda b: (b, 0, 0)),
        scratch_shapes=[
            pltpu.VMEM((T, F), jnp.float32),                      # residual stream
        ],
        compiler_params=pltpu.CompilerParams(
            dimension_semantics=("parallel",),
            vmem_limit_bytes=_vmem_limit_bytes(T, F, Cpad, layers, ksize)),
    )(h0, m_bt1, wd_packed, bd, wp, bp, wo, bo)

    return jnp.transpose(out_btc[:, :, :Cout], (0, 2, 1))         # (B, Cout, T)


def init_params(key, dim, F, Cout, layers, ksize):
    ks = jax.random.split(key, 8)

    def u(k, shape, fan_in):
        bound = 1.0 / np.sqrt(fan_in)
        return jax.random.uniform(k, shape, jnp.float32, -bound, bound)

    return {
        "w0": u(ks[0], (dim, F), dim),                      # conv_1x1 (dim -> F)
        "b0": u(ks[1], (1, F), dim),
        "wd": u(ks[2], (layers, ksize, F, F), F * ksize),   # dilated convs [l,k,cin,cout]
        "bd": u(ks[3], (layers, F), F * ksize),
        "wp": u(ks[4], (layers, F, F), F),                  # per-layer 1x1 convs
        "bp": u(ks[5], (layers, F), F),
        "wo": u(ks[6], (F, Cout), F),                       # conv_out (F -> classes)
        "bo": u(ks[7], (1, Cout), F),
    }


def ref_forward(x_nct, mask_nct, params, *, layers, ksize):
    """Pure-JAX reference using lax.conv_general_dilated (PyTorch semantics).
    Dilation is 4**l, matching the original SingleStageModel spec."""
    m = mask_nct[:, 0:1, :]

    def conv1x1(x, w, b):
        return jnp.einsum("bct,cd->bdt", x, w) + b.reshape(1, -1, 1)

    out = conv1x1(x_nct, params["w0"], params["b0"])
    for l in range(layers):
        d = 4 ** l
        pad = ((ksize - 1) // 2) * d
        w_oik = jnp.transpose(params["wd"][l], (2, 1, 0))   # (O, I, K)
        conv = jax.lax.conv_general_dilated(
            out, w_oik, window_strides=(1,), padding=[(pad, pad)],
            rhs_dilation=(d,), dimension_numbers=("NCH", "OIH", "NCH"))
        conv = conv + params["bd"][l].reshape(1, -1, 1)
        r = jax.nn.relu(conv)
        o = conv1x1(r, params["wp"][l], params["bp"][l])
        out = (out + o) * m
    return conv1x1(out, params["wo"], params["bo"]) * m


if __name__ == "__main__":
    # SingleStageModel(layers=2, num_f_maps=32, dim=4, num_classes=5, kernel_size=3)
    B, dim, T = 2, 4, 16
    F, Cout, layers, ksize = 32, 5, 2, 3

    key = jax.random.PRNGKey(0)
    kx, km, kp = jax.random.split(key, 3)
    x = jax.random.normal(kx, (B, dim, T), jnp.float32)                 # NCT
    mask = (jax.random.uniform(km, (B, Cout, T)) > 0.25).astype(jnp.float32)
    params = init_params(kp, dim, F, Cout, layers, ksize)

    out = single_stage_forward(x, mask, params, layers=layers, ksize=ksize)
    out = jax.block_until_ready(out)

    ref = ref_forward(x, mask, params, layers=layers, ksize=ksize)
    # MXU operands and the DMA'd h0 are bf16 (accumulation stays f32), so the
    # tolerance is looser than a pure-f32 check; structural bugs would be
    # orders of magnitude larger.
    np.testing.assert_allclose(np.asarray(out), np.asarray(ref),
                               rtol=5e-2, atol=5e-2)
    print("KERNEL_OK")
</pallas_src>

<mosaic_0001>
module attributes {stable_mosaic.version = 11 : i64} {
  func.func @kernel(%arg0: i32, %arg1: memref<1x16x32xbf16, #tpu.memory_space<vmem>>, %arg2: memref<1x16x1xf32, #tpu.memory_space<vmem>>, %arg3: memref<2x96x32xbf16, #tpu.memory_space<vmem>>, %arg4: memref<2x1x32xf32, #tpu.memory_space<vmem>>, %arg5: memref<2x32x32xbf16, #tpu.memory_space<vmem>>, %arg6: memref<2x1x32xf32, #tpu.memory_space<vmem>>, %arg7: memref<32x128xbf16, #tpu.memory_space<vmem>>, %arg8: memref<1x128xf32, #tpu.memory_space<vmem>>, %arg9: memref<1x16x128xf32, #tpu.memory_space<vmem>>, %arg10: memref<16x32xf32, #tpu.memory_space<vmem>>) attributes {dimension_semantics = [#tpu.dimension_semantics<parallel>], iteration_bounds = array<i64: 2>, scalar_prefetch = 0 : i64, scratch_operands = 1 : i64, tpu.core_type = #tpu.core_type<tc>, window_params = [{transform_indices = @transform_0, window_bounds = array<i64: 1, 16, 32>}, {transform_indices = @transform_1, window_bounds = array<i64: 1, 16, 1>}, {pipeline_mode = #tpu.pipeline_mode<synchronous>, transform_indices = @transform_2, window_bounds = array<i64: 2, 96, 32>}, {pipeline_mode = #tpu.pipeline_mode<synchronous>, transform_indices = @transform_3, window_bounds = array<i64: 2, 1, 32>}, {pipeline_mode = #tpu.pipeline_mode<synchronous>, transform_indices = @transform_4, window_bounds = array<i64: 2, 32, 32>}, {pipeline_mode = #tpu.pipeline_mode<synchronous>, transform_indices = @transform_5, window_bounds = array<i64: 2, 1, 32>}, {pipeline_mode = #tpu.pipeline_mode<synchronous>, transform_indices = @transform_6, window_bounds = array<i64: 32, 128>}, {pipeline_mode = #tpu.pipeline_mode<synchronous>, transform_indices = @transform_7, window_bounds = array<i64: 1, 128>}, {transform_indices = @transform_8, window_bounds = array<i64: 1, 16, 128>}]} {
    %c0 = arith.constant 0 : index
    %c0_0 = arith.constant 0 : index
    %c0_1 = arith.constant 0 : index
    %0 = vector.load %arg2[%c0, %c0_0, %c0_1] : memref<1x16x1xf32, #tpu.memory_space<vmem>>, vector<1x16x1xf32>
    %1 = vector.shape_cast %0 : vector<1x16x1xf32> to vector<16x1xf32>
    %c0_2 = arith.constant 0 : index
    %c0_3 = arith.constant 0 : index
    %c0_4 = arith.constant 0 : index
    %2 = vector.load %arg1[%c0_2, %c0_3, %c0_4] : memref<1x16x32xbf16, #tpu.memory_space<vmem>>, vector<1x16x32xbf16>
    %3 = vector.shape_cast %2 : vector<1x16x32xbf16> to vector<16x32xbf16>
    %4 = arith.extf %3 : vector<16x32xbf16> to vector<16x32xf32>
    %c0_5 = arith.constant 0 : index
    %c0_6 = arith.constant 0 : index
    %5 = vector.load %arg10[%c0_5, %c0_6] : memref<16x32xf32, #tpu.memory_space<vmem>>, vector<16x32xf32>
    tpu.vector_store %arg10[%c0_5, %c0_6], %4 {strides = array<i32>} : memref<16x32xf32, #tpu.memory_space<vmem>>, vector<16x32xf32>,
    %6 = tpu.iota {dimensions = array<i32: 0>} : vector<16x32xi32>
    %c0_7 = arith.constant 0 : index
    %c0_8 = arith.constant 0 : index
    %7 = vector.load %arg10[%c0_7, %c0_8] : memref<16x32xf32, #tpu.memory_space<vmem>>, vector<16x32xf32>
    %c1_i32 = arith.constant 1 : i32
    %8 = tpu.dynamic_rotate %7 by %c1_i32 dim 0 : vector<16x32xf32>, i32 -> vector<16x32xf32>
    %c-1_i32 = arith.constant -1 : i32
    %9 = vector.broadcast %c-1_i32 : i32 to vector<16x32xi32>
    %10 = arith.addi %6, %9 : vector<16x32xi32>
    %c0_i32 = arith.constant 0 : i32
    %11 = vector.broadcast %c0_i32 : i32 to vector<16x32xi32>
    %12 = arith.cmpi sge, %10, %11 : vector<16x32xi32>
    %c-1_i32_9 = arith.constant -1 : i32
    %13 = vector.broadcast %c-1_i32_9 : i32 to vector<16x32xi32>
    %14 = arith.addi %6, %13 : vector<16x32xi32>
    %c16_i32 = arith.constant 16 : i32
    %15 = vector.broadcast %c16_i32 : i32 to vector<16x32xi32>
    %16 = arith.cmpi slt, %14, %15 : vector<16x32xi32>
    %17 = arith.andi %12, %16 : vector<16x32xi1>
    %cst = arith.constant 0.000000e+00 : f32
    %18 = vector.broadcast %cst : f32 to vector<16x32xf32>
    %19 = arith.select %17, %8, %18 : vector<16x32xi1>, vector<16x32xf32>
    %20 = arith.truncf %19 : vector<16x32xf32> to vector<16x32xbf16>
    %21 = arith.truncf %7 : vector<16x32xf32> to vector<16x32xbf16>
    %c15_i32 = arith.constant 15 : i32
    %22 = tpu.dynamic_rotate %7 by %c15_i32 dim 0 : vector<16x32xf32>, i32 -> vector<16x32xf32>
    %c1_i32_10 = arith.constant 1 : i32
    %23 = vector.broadcast %c1_i32_10 : i32 to vector<16x32xi32>
    %24 = arith.addi %6, %23 : vector<16x32xi32>
    %c0_i32_11 = arith.constant 0 : i32
    %25 = vector.broadcast %c0_i32_11 : i32 to vector<16x32xi32>
    %26 = arith.cmpi sge, %24, %25 : vector<16x32xi32>
    %c1_i32_12 = arith.constant 1 : i32
    %27 = vector.broadcast %c1_i32_12 : i32 to vector<16x32xi32>
    %28 = arith.addi %6, %27 : vector<16x32xi32>
    %c16_i32_13 = arith.constant 16 : i32
    %29 = vector.broadcast %c16_i32_13 : i32 to vector<16x32xi32>
    %30 = arith.cmpi slt, %28, %29 : vector<16x32xi32>
    %31 = arith.andi %26, %30 : vector<16x32xi1>
    %cst_14 = arith.constant 0.000000e+00 : f32
    %32 = vector.broadcast %cst_14 : f32 to vector<16x32xf32>
    %33 = arith.select %31, %22, %32 : vector<16x32xi1>, vector<16x32xf32>
    %34 = arith.truncf %33 : vector<16x32xf32> to vector<16x32xbf16>
    %35 = tpu.concatenate %20, %21, %34 in 1 : vector<16x32xbf16>, vector<16x32xbf16>, vector<16x32xbf16> -> vector<16x96xbf16>
    %c0_15 = arith.constant 0 : index
    %c0_16 = arith.constant 0 : index
    %c0_17 = arith.constant 0 : index
    %36 = vector.load %arg3[%c0_15, %c0_16, %c0_17] : memref<2x96x32xbf16, #tpu.memory_space<vmem>>, vector<1x96x32xbf16>
    %37 = vector.shape_cast %36 : vector<1x96x32xbf16> to vector<96x32xbf16>
    %cst_18 = arith.constant dense<0.000000e+00> : vector<16x32xf32>
    %38 = tpu.matmul %35, %37, %cst_18 {dimension_numbers = #tpu.dot_dimension_numbers<[1], [0], [0], [1], [0, 0, 1, 1], [], []>} : vector<16x96xbf16>, vector<96x32xbf16>, vector<16x32xf32> -> vector<16x32xf32>
    %c0_19 = arith.constant 0 : index
    %c0_20 = arith.constant 0 : index
    %c0_21 = arith.constant 0 : index
    %39 = vector.load %arg4[%c0_19, %c0_20, %c0_21] : memref<2x1x32xf32, #tpu.memory_space<vmem>>, vector<1x1x32xf32>
    %40 = vector.shape_cast %39 : vector<1x1x32xf32> to vector<1x32xf32>
    %41 = vector.broadcast %40 : vector<1x32xf32> to vector<16x32xf32>
    %42 = arith.addf %38, %41 : vector<16x32xf32>
    %cst_22 = arith.constant 0.000000e+00 : f32
    %43 = vector.broadcast %cst_22 : f32 to vector<16x32xf32>
    %44 = arith.maximumf %42, %43 : vector<16x32xf32>
    %45 = arith.truncf %44 : vector<16x32xf32> to vector<16x32xbf16>
    %c0_23 = arith.constant 0 : index
    %c0_24 = arith.constant 0 : index
    %c0_25 = arith.constant 0 : index
    %46 = vector.load %arg5[%c0_23, %c0_24, %c0_25] : memref<2x32x32xbf16, #tpu.memory_space<vmem>>, vector<1x32x32xbf16>
    %47 = vector.shape_cast %46 : vector<1x32x32xbf16> to vector<32x32xbf16>
    %cst_26 = arith.constant dense<0.000000e+00> : vector<16x32xf32>
    %48 = tpu.matmul %45, %47, %cst_26 {dimension_numbers = #tpu.dot_dimension_numbers<[1], [0], [0], [1], [0, 0, 1, 1], [], []>} : vector<16x32xbf16>, vector<32x32xbf16>, vector<16x32xf32> -> vector<16x32xf32>
    %c0_27 = arith.constant 0 : index
    %c0_28 = arith.constant 0 : index
    %c0_29 = arith.constant 0 : index
    %49 = vector.load %arg6[%c0_27, %c0_28, %c0_29] : memref<2x1x32xf32, #tpu.memory_space<vmem>>, vector<1x1x32xf32>
    %50 = vector.shape_cast %49 : vector<1x1x32xf32> to vector<1x32xf32>
    %51 = vector.broadcast %50 : vector<1x32xf32> to vector<16x32xf32>
    %52 = arith.addf %48, %51 : vector<16x32xf32>
    %53 = arith.addf %7, %52 : vector<16x32xf32>
    %54 = vector.broadcast %1 : vector<16x1xf32> to vector<16x32xf32>
    %55 = arith.mulf %53, %54 : vector<16x32xf32>
    %c0_30 = arith.constant 0 : index
    %c0_31 = arith.constant 0 : index
    %56 = vector.load %arg10[%c0_30, %c0_31] : memref<16x32xf32, #tpu.memory_space<vmem>>, vector<16x32xf32>
    tpu.vector_store %arg10[%c0_30, %c0_31], %55 {strides = array<i32>} : memref<16x32xf32, #tpu.memory_space<vmem>>, vector<16x32xf32>,
    %c0_32 = arith.constant 0 : index
    %c0_33 = arith.constant 0 : index
    %57 = vector.load %arg10[%c0_32, %c0_33] : memref<16x32xf32, #tpu.memory_space<vmem>>, vector<16x32xf32>
    %c4_i32 = arith.constant 4 : i32
    %58 = tpu.dynamic_rotate %57 by %c4_i32 dim 0 : vector<16x32xf32>, i32 -> vector<16x32xf32>
    %c-4_i32 = arith.constant -4 : i32
    %59 = vector.broadcast %c-4_i32 : i32 to vector<16x32xi32>
    %60 = arith.addi %6, %59 : vector<16x32xi32>
    %c0_i32_34 = arith.constant 0 : i32
    %61 = vector.broadcast %c0_i32_34 : i32 to vector<16x32xi32>
    %62 = arith.cmpi sge, %60, %61 : vector<16x32xi32>
    %c-4_i32_35 = arith.constant -4 : i32
    %63 = vector.broadcast %c-4_i32_35 : i32 to vector<16x32xi32>
    %64 = arith.addi %6, %63 : vector<16x32xi32>
    %c16_i32_36 = arith.constant 16 : i32
    %65 = vector.broadcast %c16_i32_36 : i32 to vector<16x32xi32>
    %66 = arith.cmpi slt, %64, %65 : vector<16x32xi32>
    %67 = arith.andi %62, %66 : vector<16x32xi1>
    %cst_37 = arith.constant 0.000000e+00 : f32
    %68 = vector.broadcast %cst_37 : f32 to vector<16x32xf32>
    %69 = arith.select %67, %58, %68 : vector<16x32xi1>, vector<16x32xf32>
    %70 = arith.truncf %69 : vector<16x32xf32> to vector<16x32xbf16>
    %71 = arith.truncf %57 : vector<16x32xf32> to vector<16x32xbf16>
    %c12_i32 = arith.constant 12 : i32
    %72 = tpu.dynamic_rotate %57 by %c12_i32 dim 0 : vector<16x32xf32>, i32 -> vector<16x32xf32>
    %c4_i32_38 = arith.constant 4 : i32
    %73 = vector.broadcast %c4_i32_38 : i32 to vector<16x32xi32>
    %74 = arith.addi %6, %73 : vector<16x32xi32>
    %c0_i32_39 = arith.constant 0 : i32
    %75 = vector.broadcast %c0_i32_39 : i32 to vector<16x32xi32>
    %76 = arith.cmpi sge, %74, %75 : vector<16x32xi32>
    %c4_i32_40 = arith.constant 4 : i32
    %77 = vector.broadcast %c4_i32_40 : i32 to vector<16x32xi32>
    %78 = arith.addi %6, %77 : vector<16x32xi32>
    %c16_i32_41 = arith.constant 16 : i32
    %79 = vector.broadcast %c16_i32_41 : i32 to vector<16x32xi32>
    %80 = arith.cmpi slt, %78, %79 : vector<16x32xi32>
    %81 = arith.andi %76, %80 : vector<16x32xi1>
    %cst_42 = arith.constant 0.000000e+00 : f32
    %82 = vector.broadcast %cst_42 : f32 to vector<16x32xf32>
    %83 = arith.select %81, %72, %82 : vector<16x32xi1>, vector<16x32xf32>
    %84 = arith.truncf %83 : vector<16x32xf32> to vector<16x32xbf16>
    %85 = tpu.concatenate %70, %71, %84 in 1 : vector<16x32xbf16>, vector<16x32xbf16>, vector<16x32xbf16> -> vector<16x96xbf16>
    %c1 = arith.constant 1 : index
    %c0_43 = arith.constant 0 : index
    %c0_44 = arith.constant 0 : index
    %86 = vector.load %arg3[%c1, %c0_43, %c0_44] : memref<2x96x32xbf16, #tpu.memory_space<vmem>>, vector<1x96x32xbf16>
    %87 = vector.shape_cast %86 : vector<1x96x32xbf16> to vector<96x32xbf16>
    %cst_45 = arith.constant dense<0.000000e+00> : vector<16x32xf32>
    %88 = tpu.matmul %85, %87, %cst_45 {dimension_numbers = #tpu.dot_dimension_numbers<[1], [0], [0], [1], [0, 0, 1, 1], [], []>} : vector<16x96xbf16>, vector<96x32xbf16>, vector<16x32xf32> -> vector<16x32xf32>
    %c1_46 = arith.constant 1 : index
    %c0_47 = arith.constant 0 : index
    %c0_48 = arith.constant 0 : index
    %89 = vector.load %arg4[%c1_46, %c0_47, %c0_48] : memref<2x1x32xf32, #tpu.memory_space<vmem>>, vector<1x1x32xf32>
    %90 = vector.shape_cast %89 : vector<1x1x32xf32> to vector<1x32xf32>
    %91 = vector.broadcast %90 : vector<1x32xf32> to vector<16x32xf32>
    %92 = arith.addf %88, %91 : vector<16x32xf32>
    %cst_49 = arith.constant 0.000000e+00 : f32
    %93 = vector.broadcast %cst_49 : f32 to vector<16x32xf32>
    %94 = arith.maximumf %92, %93 : vector<16x32xf32>
    %95 = arith.truncf %94 : vector<16x32xf32> to vector<16x32xbf16>
    %c1_50 = arith.constant 1 : index
    %c0_51 = arith.constant 0 : index
    %c0_52 = arith.constant 0 : index
    %96 = vector.load %arg5[%c1_50, %c0_51, %c0_52] : memref<2x32x32xbf16, #tpu.memory_space<vmem>>, vector<1x32x32xbf16>
    %97 = vector.shape_cast %96 : vector<1x32x32xbf16> to vector<32x32xbf16>
    %cst_53 = arith.constant dense<0.000000e+00> : vector<16x32xf32>
    %98 = tpu.matmul %95, %97, %cst_53 {dimension_numbers = #tpu.dot_dimension_numbers<[1], [0], [0], [1], [0, 0, 1, 1], [], []>} : vector<16x32xbf16>, vector<32x32xbf16>, vector<16x32xf32> -> vector<16x32xf32>
    %c1_54 = arith.constant 1 : index
    %c0_55 = arith.constant 0 : index
    %c0_56 = arith.constant 0 : index
    %99 = vector.load %arg6[%c1_54, %c0_55, %c0_56] : memref<2x1x32xf32, #tpu.memory_space<vmem>>, vector<1x1x32xf32>
    %100 = vector.shape_cast %99 : vector<1x1x32xf32> to vector<1x32xf32>
    %101 = vector.broadcast %100 : vector<1x32xf32> to vector<16x32xf32>
    %102 = arith.addf %98, %101 : vector<16x32xf32>
    %103 = arith.addf %57, %102 : vector<16x32xf32>
    %104 = vector.broadcast %1 : vector<16x1xf32> to vector<16x32xf32>
    %105 = arith.mulf %103, %104 : vector<16x32xf32>
    %c0_57 = arith.constant 0 : index
    %c0_58 = arith.constant 0 : index
    %106 = vector.load %arg10[%c0_57, %c0_58] : memref<16x32xf32, #tpu.memory_space<vmem>>, vector<16x32xf32>
    tpu.vector_store %arg10[%c0_57, %c0_58], %105 {strides = array<i32>} : memref<16x32xf32, #tpu.memory_space<vmem>>, vector<16x32xf32>,
    %c0_59 = arith.constant 0 : index
    %c0_60 = arith.constant 0 : index
    %107 = vector.load %arg10[%c0_59, %c0_60] : memref<16x32xf32, #tpu.memory_space<vmem>>, vector<16x32xf32>
    %108 = arith.truncf %107 : vector<16x32xf32> to vector<16x32xbf16>
    %c0_61 = arith.constant 0 : index
    %c0_62 = arith.constant 0 : index
    %109 = vector.load %arg7[%c0_61, %c0_62] : memref<32x128xbf16, #tpu.memory_space<vmem>>, vector<32x128xbf16>
    %cst_63 = arith.constant dense<0.000000e+00> : vector<16x128xf32>
    %110 = tpu.matmul %108, %109, %cst_63 {dimension_numbers = #tpu.dot_dimension_numbers<[1], [0], [0], [1], [0, 0, 1, 1], [], []>} : vector<16x32xbf16>, vector<32x128xbf16>, vector<16x128xf32> -> vector<16x128xf32>
    %c0_64 = arith.constant 0 : index
    %c0_65 = arith.constant 0 : index
    %111 = vector.load %arg8[%c0_64, %c0_65] : memref<1x128xf32, #tpu.memory_space<vmem>>, vector<1x128xf32>
    %112 = vector.broadcast %111 : vector<1x128xf32> to vector<16x128xf32>
    %113 = arith.addf %110, %112 : vector<16x128xf32>
    %114 = vector.broadcast %1 : vector<16x1xf32> to vector<16x128xf32>
    %115 = arith.mulf %113, %114 : vector<16x128xf32>
    %c0_66 = arith.constant 0 : index
    %c0_67 = arith.constant 0 : index
    %c0_68 = arith.constant 0 : index
    %116 = vector.load %arg9[%c0_66, %c0_67, %c0_68] : memref<1x16x128xf32, #tpu.memory_space<vmem>>, vector<1x16x128xf32>
    %117 = vector.shape_cast %116 : vector<1x16x128xf32> to vector<16x128xf32>
    %118 = vector.shape_cast %115 : vector<16x128xf32> to vector<1x16x128xf32>
    tpu.vector_store %arg9[%c0_66, %c0_67, %c0_68], %118 {strides = array<i32>} : memref<1x16x128xf32, #tpu.memory_space<vmem>>, vector<1x16x128xf32>,
    return
  }
  func.func @transform_0(%arg0: i32) -> (i32, i32, i32) {
    %c0_i32 = arith.constant 0 : i32
    %c0_i32_0 = arith.constant 0 : i32
    %c0_i32_1 = arith.constant 0 : i32
    return %arg0, %c0_i32, %c0_i32_0 : i32, i32, i32
  }
  func.func @transform_1(%arg0: i32) -> (i32, i32, i32) {
    %c0_i32 = arith.constant 0 : i32
    %c0_i32_0 = arith.constant 0 : i32
    %c0_i32_1 = arith.constant 0 : i32
    return %arg0, %c0_i32, %c0_i32_0 : i32, i32, i32
  }
  func.func @transform_2(%arg0: i32) -> (i32, i32, i32) {
    %c0_i32 = arith.constant 0 : i32
    %c0_i32_0 = arith.constant 0 : i32
    %c0_i32_1 = arith.constant 0 : i32
    %c0_i32_2 = arith.constant 0 : i32
    return %c0_i32, %c0_i32_0, %c0_i32_1 : i32, i32, i32
  }
  func.func @transform_3(%arg0: i32) -> (i32, i32, i32) {
    %c0_i32 = arith.constant 0 : i32
    %c0_i32_0 = arith.constant 0 : i32
    %c0_i32_1 = arith.constant 0 : i32
    %c0_i32_2 = arith.constant 0 : i32
    return %c0_i32, %c0_i32_0, %c0_i32_1 : i32, i32, i32
  }
  func.func @transform_4(%arg0: i32) -> (i32, i32, i32) {
    %c0_i32 = arith.constant 0 : i32
    %c0_i32_0 = arith.constant 0 : i32
    %c0_i32_1 = arith.constant 0 : i32
    %c0_i32_2 = arith.constant 0 : i32
    return %c0_i32, %c0_i32_0, %c0_i32_1 : i32, i32, i32
  }
  func.func @transform_5(%arg0: i32) -> (i32, i32, i32) {
    %c0_i32 = arith.constant 0 : i32
    %c0_i32_0 = arith.constant 0 : i32
    %c0_i32_1 = arith.constant 0 : i32
    %c0_i32_2 = arith.constant 0 : i32
    return %c0_i32, %c0_i32_0, %c0_i32_1 : i32, i32, i32
  }
  func.func @transform_6(%arg0: i32) -> (i32, i32) {
    %c0_i32 = arith.constant 0 : i32
    %c0_i32_0 = arith.constant 0 : i32
    %c0_i32_1 = arith.constant 0 : i32
    return %c0_i32, %c0_i32_0 : i32, i32
  }
  func.func @transform_7(%arg0: i32) -> (i32, i32) {
    %c0_i32 = arith.constant 0 : i32
    %c0_i32_0 = arith.constant 0 : i32
    %c0_i32_1 = arith.constant 0 : i32
    return %c0_i32, %c0_i32_0 : i32, i32
  }
  func.func @transform_8(%arg0: i32) -> (i32, i32, i32) {
    %c0_i32 = arith.constant 0 : i32
    %c0_i32_0 = arith.constant 0 : i32
    %c0_i32_1 = arith.constant 0 : i32
    return %arg0, %c0_i32, %c0_i32_0 : i32, i32, i32
  }
}

</mosaic_0001>

<llo_original>
// kernel: tpu_custom_call.1
$region0: #{tpu_custom_call.1}
  #allocation0 [shape = 'u32[]', space=smem, size = 0x4, offset = 0x4, fixed_abs, tag = 'smem constant byte address 0x4 - core index']
  #allocation1 [shape = 'u32[72,128]{1,0:T(1,128)}', space=vmem, size = 0x9000, scoped, tag = 'internal scratch']
  #allocation2 [shape = 'f32[16,32]{1,0:T(8,128)}', space=vmem, size = 0x2000, scoped, tag = 'scratch operand']
  %s0 = inlined_call_operand.vmem [shape: bf16[2,16,32], index: 0, kind: input, shape index: {}]
  %s1 = inlined_call_operand.vmem [shape: f32[2,16,1], index: 1, kind: input, shape index: {}]
  %s2 = inlined_call_operand.vmem [shape: bf16[2,96,32], index: 2, kind: input, shape index: {}]
  %s3 = inlined_call_operand.vmem [shape: f32[2,1,32], index: 3, kind: input, shape index: {}]
  %s4 = inlined_call_operand.vmem [shape: bf16[2,32,32], index: 4, kind: input, shape index: {}]
  %s5 = inlined_call_operand.vmem [shape: f32[2,1,32], index: 5, kind: input, shape index: {}]
  %s6 = inlined_call_operand.vmem [shape: bf16[32,128], index: 6, kind: input, shape index: {}]
  %s7 = inlined_call_operand.vmem [shape: f32[1,128], index: 7, kind: input, shape index: {}]
  %s8 = inlined_call_operand.hbm [shape: f32[2,16,128], index: 8, kind: output, shape index: {}]
  %s9 = sld [smem:[#allocation0]]
  $region65: #{tpu_custom_call.1} parent=0
    _
  %s11 = ssub.s32 1, %s9
  %s12 = scalar_select 0, %s11, %s9
  $region1: #{tpu_custom_call.1} parent=0
    #allocation3 [shape = 'u8[16384]{0}', space=vmem, size = 0x4000, scoped, tag = 'output window, operand 0']
    #allocation4 [shape = 's32[2]{0}', space=sflag, size = 0x8, scoped, tag = 'scoped memory for tpu_custom_call.1']
    %13 = vsyncpa [#allocation4], 0
    %s14 = scalar_lea.sflag [#allocation4], 1
    %15 = vsyncpa %s14, 0
    loop: start=0, step=1, limit=4
    $region2: #{tpu_custom_call.1} parent=1 // loop_pre_header
      _
    $region3: #{tpu_custom_call.1} parent=1 // loop_header
      %s17 = sphi 0, %s21
      %p18 = scmp.ge.s32.totalorder %s17, 4
      %s27 = sphi 0, %s29
      %s30 = sphi 0, %s27
      %s31 = sphi 0, %s30
      %s47 = sphi 0, %s31
      %s53 = sphi 0, %s55
      %s56 = sphi 0, %s53
      %s57 = sphi 0, %s56
      %s73 = sphi 0, %s57
      %s77 = sphi 0, %s77
      %s79 = sphi 0, %s77
      %s80 = sphi 0, %s79
      %s94 = sphi 0, %s80
      %s98 = sphi 0, %s98
      %s100 = sphi 0, %s98
      %s101 = sphi 0, %s100
      %s115 = sphi 0, %s101
      %s119 = sphi 0, %s119
      %s121 = sphi 0, %s119
      %s122 = sphi 0, %s121
      %s136 = sphi 0, %s122
      %s140 = sphi 0, %s140
      %s142 = sphi 0, %s140
      %s143 = sphi 0, %s142
      %s157 = sphi 0, %s143
      %s161 = sphi 0, %s161
      %s163 = sphi 0, %s161
      %s164 = sphi 0, %s163
      %s178 = sphi 0, %s164
      %s182 = sphi 0, %s182
      %s184 = sphi 0, %s182
      %s185 = sphi 0, %s184
      %s199 = sphi 0, %s185
      %s205 = sphi 0, %s207
      %s208 = sphi 0, %s205
      %s209 = sphi 0, %s208
      %s225 = sphi 0, %s209
    $region4: #{tpu_custom_call.1} parent=1 // loop_header_branch
      %20 = sbr.rel (%p18) target = $region8
    $region5: #{tpu_custom_call.1} parent=1 // loop_body
      %s22 = ssub.s32 %s17, 1
      %s23 = ssub.s32 %s17, 2
      %s24 = sadd.s32 %s17, 1
      %s25 = ssub.s32 %s17, %s24
      %p26 = scmp.eq.s32.totalorder %s25, 0
      %s28 = sadd.s32 %s27, 1
      %s29 = scalar_select %p26, %s27, %s28
      %p32 = pneg %p26
      %p33 = scmp.eq.s32.totalorder %s17, 1
      %p34 = por %p32, %p33
      %p35 = scmp.ne.s32.totalorder %s27, %s30
      %p36 = scmp.eq.s32.totalorder %s17, 0
      %p37 = por %p35, %p36
      %p38 = scmp.ne.s32.totalorder %s27, %s30
      %p39 = scmp.eq.s32.totalorder %s22, 1
      %p40 = por %p38, %p39
      %p41 = scmp.ne.s32.totalorder %s30, %s31
      %p42 = scmp.eq.s32.totalorder %s22, 0
      %p43 = por %p41, %p42
      %p44 = scmp.ne.s32.totalorder %s30, %s31
      %p45 = scmp.eq.s32.totalorder %s23, 1
      %p46 = por %p44, %p45
      %p48 = scmp.ne.s32.totalorder %s31, %s47
      %p49 = scmp.eq.s32.totalorder %s23, 0
      %p50 = por %p48, %p49
      %s51 = ssub.s32 %s17, %s24
      %p52 = scmp.eq.s32.totalorder %s51, 0
      %s54 = sadd.s32 %s53, 1
      %s55 = scalar_select %p52, %s53, %s54
      %p58 = pneg %p52
      %p59 = scmp.eq.s32.totalorder %s17, 1
      %p60 = por %p58, %p59
      %p61 = scmp.ne.s32.totalorder %s53, %s56
      %p62 = scmp.eq.s32.totalorder %s17, 0
      %p63 = por %p61, %p62
      %p64 = scmp.ne.s32.totalorder %s53, %s56
      %p65 = scmp.eq.s32.totalorder %s22, 1
      %p66 = por %p64, %p65
      %p67 = scmp.ne.s32.totalorder %s56, %s57
      %p68 = scmp.eq.s32.totalorder %s22, 0
      %p69 = por %p67, %p68
      %p70 = scmp.ne.s32.totalorder %s56, %s57
      %p71 = scmp.eq.s32.totalorder %s23, 1
      %p72 = por %p70, %p71
      %p74 = scmp.ne.s32.totalorder %s57, %s73
      %p75 = scmp.eq.s32.totalorder %s23, 0
      %p76 = por %p74, %p75
      %s78 = sadd.s32 %s77, 1
      %p81 = scmp.eq.s32.totalorder %s17, 1
      %p82 = scmp.ne.s32.totalorder %s77, %s79
      %p83 = scmp.eq.s32.totalorder %s17, 0
      %p84 = por %p82, %p83
      %p85 = scmp.ne.s32.totalorder %s77, %s79
      %p86 = scmp.eq.s32.totalorder %s22, 1
      %p87 = por %p85, %p86
      %p88 = scmp.ne.s32.totalorder %s79, %s80
      %p89 = scmp.eq.s32.totalorder %s22, 0
      %p90 = por %p88, %p89
      %p91 = scmp.ne.s32.totalorder %s79, %s80
      %p92 = scmp.eq.s32.totalorder %s23, 1
      %p93 = por %p91, %p92
      %p95 = scmp.ne.s32.totalorder %s80, %s94
      %p96 = scmp.eq.s32.totalorder %s23, 0
      %p97 = por %p95, %p96
      %s99 = sadd.s32 %s98, 1
      %p102 = scmp.eq.s32.totalorder %s17, 1
      %p103 = scmp.ne.s32.totalorder %s98, %s100
      %p104 = scmp.eq.s32.totalorder %s17, 0
      %p105 = por %p103, %p104
      %p106 = scmp.ne.s32.totalorder %s98, %s100
      %p107 = scmp.eq.s32.totalorder %s22, 1
      %p108 = por %p106, %p107
      %p109 = scmp.ne.s32.totalorder %s100, %s101
      %p110 = scmp.eq.s32.totalorder %s22, 0
      %p111 = por %p109, %p110
      %p112 = scmp.ne.s32.totalorder %s100, %s101
      %p113 = scmp.eq.s32.totalorder %s23, 1
      %p114 = por %p112, %p113
      %p116 = scmp.ne.s32.totalorder %s101, %s115
      %p117 = scmp.eq.s32.totalorder %s23, 0
      %p118 = por %p116, %p117
      %s120 = sadd.s32 %s119, 1
      %p123 = scmp.eq.s32.totalorder %s17, 1
      %p124 = scmp.ne.s32.totalorder %s119, %s121
      %p125 = scmp.eq.s32.totalorder %s17, 0
      %p126 = por %p124, %p125
      %p127 = scmp.ne.s32.totalorder %s119, %s121
      %p128 = scmp.eq.s32.totalorder %s22, 1
      %p129 = por %p127, %p128
      %p130 = scmp.ne.s32.totalorder %s121, %s122
      %p131 = scmp.eq.s32.totalorder %s22, 0
      %p132 = por %p130, %p131
      %p133 = scmp.ne.s32.totalorder %s121, %s122
      %p134 = scmp.eq.s32.totalorder %s23, 1
      %p135 = por %p133, %p134
      %p137 = scmp.ne.s32.totalorder %s122, %s136
      %p138 = scmp.eq.s32.totalorder %s23, 0
      %p139 = por %p137, %p138
      %s141 = sadd.s32 %s140, 1
      %p144 = scmp.eq.s32.totalorder %s17, 1
      %p145 = scmp.ne.s32.totalorder %s140, %s142
      %p146 = scmp.eq.s32.totalorder %s17, 0
      %p147 = por %p145, %p146
      %p148 = scmp.ne.s32.totalorder %s140, %s142
      %p149 = scmp.eq.s32.totalorder %s22, 1
      %p150 = por %p148, %p149
      %p151 = scmp.ne.s32.totalorder %s142, %s143
      %p152 = scmp.eq.s32.totalorder %s22, 0
      %p153 = por %p151, %p152
      %p154 = scmp.ne.s32.totalorder %s142, %s143
      %p155 = scmp.eq.s32.totalorder %s23, 1
      %p156 = por %p154, %p155
      %p158 = scmp.ne.s32.totalorder %s143, %s157
      %p159 = scmp.eq.s32.totalorder %s23, 0
      %p160 = por %p158, %p159
      %s162 = sadd.s32 %s161, 1
      %p165 = scmp.eq.s32.totalorder %s17, 1
      %p166 = scmp.ne.s32.totalorder %s161, %s163
      %p167 = scmp.eq.s32.totalorder %s17, 0
      %p168 = por %p166, %p167
      %p169 = scmp.ne.s32.totalorder %s161, %s163
      %p170 = scmp.eq.s32.totalorder %s22, 1
      %p171 = por %p169, %p170
      %p172 = scmp.ne.s32.totalorder %s163, %s164
      %p173 = scmp.eq.s32.totalorder %s22, 0
      %p174 = por %p172, %p173
      %p175 = scmp.ne.s32.totalorder %s163, %s164
      %p176 = scmp.eq.s32.totalorder %s23, 1
      %p177 = por %p175, %p176
      %p179 = scmp.ne.s32.totalorder %s164, %s178
      %p180 = scmp.eq.s32.totalorder %s23, 0
      %p181 = por %p179, %p180
      %s183 = sadd.s32 %s182, 1
      %p186 = scmp.eq.s32.totalorder %s17, 1
      %p187 = scmp.ne.s32.totalorder %s182, %s184
      %p188 = scmp.eq.s32.totalorder %s17, 0
      %p189 = por %p187, %p188
      %p190 = scmp.ne.s32.totalorder %s182, %s184
      %p191 = scmp.eq.s32.totalorder %s22, 1
      %p192 = por %p190, %p191
      %p193 = scmp.ne.s32.totalorder %s184, %s185
      %p194 = scmp.eq.s32.totalorder %s22, 0
      %p195 = por %p193, %p194
      %p196 = scmp.ne.s32.totalorder %s184, %s185
      %p197 = scmp.eq.s32.totalorder %s23, 1
      %p198 = por %p196, %p197
      %p200 = scmp.ne.s32.totalorder %s185, %s199
      %p201 = scmp.eq.s32.totalorder %s23, 0
      %p202 = por %p200, %p201
      %s203 = ssub.s32 %s17, %s24
      %p204 = scmp.eq.s32.totalorder %s203, 0
      %s206 = sadd.s32 %s205, 1
      %s207 = scalar_select %p204, %s205, %s206
      %p210 = pneg %p204
      %p211 = scmp.eq.s32.totalorder %s17, 1
      %p212 = por %p210, %p211
      %p213 = scmp.ne.s32.totalorder %s205, %s208
      %p214 = scmp.eq.s32.totalorder %s17, 0
      %p215 = por %p213, %p214
      %p216 = scmp.ne.s32.totalorder %s205, %s208
      %p217 = scmp.eq.s32.totalorder %s22, 1
      %p218 = por %p216, %p217
      %p219 = scmp.ne.s32.totalorder %s208, %s209
      %p220 = scmp.eq.s32.totalorder %s22, 0
      %p221 = por %p219, %p220
      %p222 = scmp.ne.s32.totalorder %s208, %s209
      %p223 = scmp.eq.s32.totalorder %s23, 1
      %p224 = por %p222, %p223
      %p226 = scmp.ne.s32.totalorder %s209, %s225
      %p227 = scmp.eq.s32.totalorder %s23, 0
      %p228 = por %p226, %p227
      %p229 = scmp.le.s32.totalorder 1, %s17
      %p230 = scmp.lt.s32.totalorder %s17, 3
      %p231 = pnand %p229, %p230
      %p232 = pneg %p231
      // Predicated region
      $region9: #{tpu_custom_call.1} parent=5 // pred_check
        _
      $region10: #{tpu_custom_call.1} parent=5 // pred_check_branch
        %234 = sbr.rel (%p231) target = $region12
      $region11: #{tpu_custom_call.1} parent=5 // pred_region
        %s235 = ssub.s32 %s17, 1
        // Predicated region
        $region13: #{tpu_custom_call.1} parent=11 // pred_check
          %p236 = pneg %p90
        $region14: #{tpu_custom_call.1} parent=11 // pred_check_branch
          %238 = sbr.rel (%p236) target = $region16
        $region15: #{tpu_custom_call.1} parent=11 // pred_region
          _
        $region16: #{tpu_custom_call.1} parent=11 // pred_fallthru
          _
        // Predicated region
        $region17: #{tpu_custom_call.1} parent=11 // pred_check
          %p239 = pneg %p111
        $region18: #{tpu_custom_call.1} parent=11 // pred_check_branch
          %241 = sbr.rel (%p239) target = $region20
        $region19: #{tpu_custom_call.1} parent=11 // pred_region
          _
        $region20: #{tpu_custom_call.1} parent=11 // pred_fallthru
          _
        // Predicated region
        $region21: #{tpu_custom_call.1} parent=11 // pred_check
          %p242 = pneg %p132
        $region22: #{tpu_custom_call.1} parent=11 // pred_check_branch
          %244 = sbr.rel (%p242) target = $region24
        $region23: #{tpu_custom_call.1} parent=11 // pred_region
          _
        $region24: #{tpu_custom_call.1} parent=11 // pred_fallthru
          _
        // Predicated region
        $region25: #{tpu_custom_call.1} parent=11 // pred_check
          %p245 = pneg %p153
        $region26: #{tpu_custom_call.1} parent=11 // pred_check_branch
          %247 = sbr.rel (%p245) target = $region28
        $region27: #{tpu_custom_call.1} parent=11 // pred_region
          _
        $region28: #{tpu_custom_call.1} parent=11 // pred_fallthru
          _
        // Predicated region
        $region29: #{tpu_custom_call.1} parent=11 // pred_check
          %p248 = pneg %p174
        $region30: #{tpu_custom_call.1} parent=11 // pred_check_branch
          %250 = sbr.rel (%p248) target = $region32
        $region31: #{tpu_custom_call.1} parent=11 // pred_region
          _
        $region32: #{tpu_custom_call.1} parent=11 // pred_fallthru
          _
        // Predicated region
        $region33: #{tpu_custom_call.1} parent=11 // pred_check
          %p251 = pneg %p195
        $region34: #{tpu_custom_call.1} parent=11 // pred_check_branch
          %253 = sbr.rel (%p251) target = $region36
        $region35: #{tpu_custom_call.1} parent=11 // pred_region
          _
        $region36: #{tpu_custom_call.1} parent=11 // pred_fallthru
          _
      $region12: #{tpu_custom_call.1} parent=5 // pred_fallthru
        _
      %p254 = scmp.lt.s32.totalorder %s17, 2
      // Predicated region
      $region37: #{tpu_custom_call.1} parent=5 // pred_check
        %p255 = pneg %p254
      $region38: #{tpu_custom_call.1} parent=5 // pred_check_branch
        %257 = sbr.rel (%p255) target = $region40
      $region39: #{tpu_custom_call.1} parent=5 // pred_region
        // Predicated region
        $region41: #{tpu_custom_call.1} parent=39 // pred_check
          %p258 = pneg %p37
        $region42: #{tpu_custom_call.1} parent=39 // pred_check_branch
          %260 = sbr.rel (%p258) target = $region44
        $region43: #{tpu_custom_call.1} parent=39 // pred_region
          %p261 = scmp.lt.s32.totalorder %s17, 1
          %s262 = scalar_select %p261, %s17, 1
          %s263 = smul.addr %s262, 2
          %s264 = smul.addr %s263, 4
          %s265 = scalar_lea.vmem %s0, %s264
        $region44: #{tpu_custom_call.1} parent=39 // pred_fallthru
          _
        // Predicated region
        $region45: #{tpu_custom_call.1} parent=39 // pred_check
          %p266 = pneg %p63
        $region46: #{tpu_custom_call.1} parent=39 // pred_check_branch
          %268 = sbr.rel (%p266) target = $region48
        $region47: #{tpu_custom_call.1} parent=39 // pred_region
          %p269 = scmp.lt.s32.totalorder %s17, 1
          %s270 = scalar_select %p269, %s17, 1
          %s271 = smul.addr %s270, 2
          %s272 = smul.addr %s271, 8
          %s273 = scalar_lea.vmem %s1, %s272
        $region48: #{tpu_custom_call.1} parent=39 // pred_fallthru
          _
      $region40: #{tpu_custom_call.1} parent=5 // pred_fallthru
        _
      %p274 = scmp.le.s32.totalorder 1, %s17
      %p275 = scmp.lt.s32.totalorder %s17, 3
      %p276 = pnand %p274, %p275
      %p277 = pneg %p276
      // Predicated region
      $region49: #{tpu_custom_call.1} parent=5 // pred_check
        _
      $region50: #{tpu_custom_call.1} parent=5 // pred_check_branch
        %279 = sbr.rel (%p276) target = $region52
      $region51: #{tpu_custom_call.1} parent=5 // pred_region
        %s280 = ssub.s32 %s17, 1
        %p281 = scmp.lt.s32.totalorder %s22, 1
        %s282 = scalar_select %p281, %s22, 1
        %s283 = smul.addr %s282, 2
        %s284 = smul.addr %s283, 4
        %s285 = scalar_lea.vmem %s0, %s284
        %p286 = pneg %p43
        %p287 = pneg %p40
        %p288 = scmp.lt.s32.totalorder %s22, 1
        %s289 = scalar_select %p288, %s22, 1
        %s290 = smul.addr %s289, 2
        %s291 = smul.addr %s290, 8
        %s292 = scalar_lea.vmem %s1, %s291
        %p293 = pneg %p69
        %p294 = pneg %p66
        %p295 = pneg %p90
        %p296 = pneg %p87
        %p297 = pneg %p111
        %p298 = pneg %p108
        %p299 = pneg %p132
        %p300 = pneg %p129
        %p301 = pneg %p153
        %p302 = pneg %p150
        %p303 = pneg %p174
        %p304 = pneg %p171
        %p305 = pneg %p195
        %p306 = pneg %p192
        %p307 = pneg %p221
        %p308 = pneg %p218
        %s309 = sand.u32 %s208, 1
        %s310 = scalar_lea.sflag [#allocation4], %s309
        %s311 = sand.u32 %s208, 1
        %s312 = smul.addr %s311, 16
        %s313 = scalar_lea.vmem [#allocation3], %s312
        %p314 = scmp.lt.s32.totalorder %s22, 1
        %s315 = scalar_select %p314, %s22, 1
        %s316 = smul.addr %s315, 2
        %s317 = smul.addr %s316, 4
        %s318 = scalar_lea.vmem %s0, %s317
        %p319 = scmp.lt.s32.totalorder %s22, 1
        %s320 = scalar_select %p319, %s22, 1
        %s321 = smul.addr %s320, 2
        %s322 = smul.addr %s321, 8
        %s323 = scalar_lea.vmem %s1, %s322
        %v325 = vld [vmem:[%s323] sm:$0xff]
        %v326 = vld [vmem:[%s323 + $0x8] sm:$0xff]
        %v327 = vld [vmem:[%s318] sm:$0xf]
        %v328 = vld [vmem:[%s318 + $0x4] sm:$0xf]
        %v329 = vunpack.c.l.bf16 %v327
        %v330 = vunpack.c.l.bf16 %v328
        %vm331 = vcmask 261120
        %332 = vst.msk [vmem:[#allocation2] sm:$0xff] %vm331, %v329
        %333 = vst.msk [vmem:[#allocation2 + $0x8] sm:$0xff] %vm331, %v330
        %v334 = vlaneseq
        %v335 = vshrl.u32 %v334, 7
        %v336 = vadd.s32 %v335, 8
        %v337 = vld [vmem:[#allocation2] sm:$0xff]
        %v338 = vld [vmem:[#allocation2 + $0x8] sm:$0xff]
        %v339 = vrot.slane %v337, 7
        %v340 = vrot.slane %v338, 7
        %vm341 = vcmp.lt.s32.totalorder %v335, 1
        %v342 = vsel %vm341, %v339, %v340
        %v343 = vsel %vm341, %v340, %v339
        %v344 = vadd.s32 %v335, 4294967295
        %v345 = vadd.s32 %v336, 4294967295
        %vm346 = vcmp.ge.s32.totalorder %v344, 0
        %vm347 = vcmp.ge.s32.totalorder %v345, 0
        %vm348 = vcmp.lt.s32.totalorder %v344, 16
        %vm349 = vcmp.lt.s32.totalorder %v345, 16
        %vm350 = vmand %vm346, %vm348
        %vm351 = vmand %vm347, %vm349
        %v352 = vsel %vm350, %v343, 0.0
        %v353 = vsel %vm351, %v342, 0.0
        %v354 = vpack.c.bf16 %v352, %v352
        %v355 = vpack.c.bf16 %v353, %v353
        %v356 = vpack.c.bf16 %v337, %v337
        %v357 = vpack.c.bf16 %v338, %v338
        %v358 = vrot.slane %v337, 1
        %v359 = vrot.slane %v338, 1
        %vm360 = vcmp.lt.s32.totalorder %v335, 7
        %v361 = vsel %vm360, %v358, %v359
        %v362 = vsel %vm360, %v359, %v358
        %v363 = vadd.s32 %v335, 1
        %v364 = vadd.s32 %v336, 1
        %vm365 = vcmp.ge.s32.totalorder %v363, 0
        %vm366 = vcmp.ge.s32.totalorder %v364, 0
        %vm367 = vcmp.lt.s32.totalorder %v363, 16
        %vm368 = vcmp.lt.s32.totalorder %v364, 16
        %vm369 = vmand %vm365, %vm367
        %vm370 = vmand %vm366, %vm368
        %v371 = vsel %vm369, %v361, 0.0
        %v372 = vsel %vm370, %v362, 0.0
        %v373 = vpack.c.bf16 %v371, %v371
        %v374 = vpack.c.bf16 %v372, %v372
        %v377 = vunpack.c.l.b16 %v354
        %v378 = vunpack.c.l.b16 %v355
        %v379 = vpack.c.b16 %v378, %v377
        %v382 = vunpack.c.l.b16 %v356
        %v383 = vunpack.c.l.b16 %v357
        %v384 = vpack.c.b16 %v383, %v382
        %385 = vrot.lane.b32.xlu0 %v384, 32
        %v386 = vpop.permute.xlu0 %385
        %v389 = vunpack.c.l.b16 %v373
        %v390 = vunpack.c.l.b16 %v374
        %v391 = vpack.c.b16 %v390, %v389
        %392 = vrot.lane.b32.xlu0 %v391, 64
        %v393 = vpop.permute.xlu0 %392
        %v396 = vsel %vm331, %v379, %v386
        %vm397 = vcmask 523264
        %v399 = vsel %vm397, %v396, %v393
        %v400 = vld [vmem:[%s2] sm:$0xf]
        %v401 = vld [vmem:[%s2 + $0x4] sm:$0xf]
        %v402 = vld [vmem:[%s2 + $0x8] sm:$0xf]
        %v403 = vld [vmem:[%s2 + $0xc] sm:$0xf]
        %v404 = vld [vmem:[%s2 + $0x10] sm:$0xf]
        %v405 = vld [vmem:[%s2 + $0x14] sm:$0xf]
        %v406 = vld [vmem:[%s2 + $0x18] sm:$0xf]
        %v407 = vld [vmem:[%s2 + $0x1c] sm:$0xf]
        %v408 = vld [vmem:[%s2 + $0x20] sm:$0xf]
        %v409 = vld [vmem:[%s2 + $0x24] sm:$0xf]
        %v410 = vld [vmem:[%s2 + $0x28] sm:$0xf]
        %v411 = vld [vmem:[%s2 + $0x2c] sm:$0xf]
        %v412 = vld [vmem:[%s3] sm:$0x1]
        %v414 = vperm.slane %v412, 0
        %v428 = vunpack.c.l.b16 %v400
        %v429 = vunpack.c.l.b16 %v401
        %v430 = vunpack.c.l.b16 %v402
        %v431 = vunpack.c.l.b16 %v403
        %v432 = vunpack.c.l.b16 %v404
        %v433 = vunpack.c.l.b16 %v405
        %v434 = vunpack.c.l.b16 %v406
        %v435 = vunpack.c.l.b16 %v407
        %v436 = vunpack.c.l.b16 %v408
        %v437 = vunpack.c.l.b16 %v409
        %v438 = vunpack.c.l.b16 %v410
        %v439 = vunpack.c.l.b16 %v411
        %v440 = vpack.c.b16 %v429, %v428
        %v441 = vpack.c.b16 %v431, %v430
        %v442 = vpack.c.b16 %v433, %v432
        %v443 = vpack.c.b16 %v435, %v434
        %v444 = vpack.c.b16 %v437, %v436
        %v445 = vpack.c.b16 %v439, %v438
        %vm452 = vcmask 785408
        %v453 = vsel %vm452, %v399, 0
        %455 = vmatpush.bf16.msra.mxu0 0
        %456 = vmatpush.bf16.msra.mxu0 0
        %457 = vmatpush.bf16.msra.mxu0 %v445
        %458 = vmatpush.bf16.msra.mxu0 %v444
        %459 = vmatpush.bf16.msra.mxu0 %v443
        %460 = vmatpush.bf16.msra.mxu0 %v442
        %461 = vmatpush.bf16.msra.mxu0 %v441
        %462 = vmatpush.bf16.msra.mxu0 %v440
        %463 = vmatmul.bf16.gmra.mxu0 %v453
        %v464 = vpop.f32.mrf.mxu0
        %v465 = vadd.f32 %v414, %v464
        %v466 = vpop.f32.mrf.mxu0
        %v467 = vadd.f32 %v414, %v466
        %468 = vdwg.mxu0
        %v469 = vmax.f32 %v465, 0.0
        %v470 = vmax.f32 %v467, 0.0
        %v471 = vpack.c.bf16 %v470, %v469
        %v472 = vld [vmem:[%s4] sm:$0xf]
        %v473 = vld [vmem:[%s4 + $0x4] sm:$0xf]
        %v474 = vld [vmem:[%s4 + $0x8] sm:$0xf]
        %v475 = vld [vmem:[%s4 + $0xc] sm:$0xf]
        %v476 = vld [vmem:[%s5] sm:$0x1]
        %v478 = vperm.slane %v476, 0
        %v484 = vunpack.c.l.b16 %v472
        %v485 = vunpack.c.l.b16 %v473
        %v486 = vunpack.c.l.b16 %v474
        %v487 = vunpack.c.l.b16 %v475
        %v488 = vpack.c.b16 %v485, %v484
        %v489 = vpack.c.b16 %v487, %v486
        %v493 = vsel %vm331, %v471, 0
        %495 = vmatpush.bf16.msra.mxu0 0
        %496 = vmatpush.bf16.msra.mxu0 0
        %497 = vmatpush.bf16.msra.mxu0 0
        %498 = vmatpush.bf16.msra.mxu0 0
        %499 = vmatpush.bf16.msra.mxu0 0
        %500 = vmatpush.bf16.msra.mxu0 0
        %501 = vmatpush.bf16.msra.mxu0 %v489
        %502 = vmatpush.bf16.msra.mxu0 %v488
        %503 = vmatmul.bf16.gmra.mxu0 %v493
        %v504 = vpop.f32.mrf.mxu0
        %v505 = vadd.f32 %v478, %v504
        %v506 = vpop.f32.mrf.mxu0
        %v507 = vadd.f32 %v478, %v506
        %508 = vdwg.mxu0
        %v509 = vadd.f32 %v337, %v505
        %v510 = vadd.f32 %v338, %v507
        %512 = vset.pattern.permute.xlu0 0
        %513 = vperm.xlu0 %512, %v325
        %v514 = vpop.permute.xlu0 %513
        %517 = vset.pattern.permute.xlu0 0
        %518 = vperm.xlu0 %517, %v326
        %v519 = vpop.permute.xlu0 %518
        %v521 = vmul.f32 %v509, %v514
        %v522 = vmul.f32 %v510, %v519
        %523 = vst.msk [vmem:[#allocation2] sm:$0xff] %vm331, %v521
        %524 = vst.msk [vmem:[#allocation2 + $0x8] sm:$0xff] %vm331, %v522
        %v525 = vld [vmem:[#allocation2] sm:$0xff]
        %v526 = vld [vmem:[#allocation2 + $0x8] sm:$0xff]
        %v527 = vrot.slane %v525, 4
        %v528 = vrot.slane %v526, 4
        %vm529 = vcmp.lt.s32.totalorder %v335, 4
        %v530 = vsel %vm529, %v527, %v528
        %v531 = vsel %vm529, %v528, %v527
        %v532 = vadd.s32 %v335, 4294967292
        %v533 = vadd.s32 %v336, 4294967292
        %vm534 = vcmp.ge.s32.totalorder %v532, 0
        %vm535 = vcmp.ge.s32.totalorder %v533, 0
        %vm536 = vcmp.lt.s32.totalorder %v532, 16
        %vm537 = vcmp.lt.s32.totalorder %v533, 16
        %vm538 = vmand %vm534, %vm536
        %vm539 = vmand %vm535, %vm537
        %v540 = vsel %vm538, %v531, 0.0
        %v541 = vsel %vm539, %v530, 0.0
        %v542 = vpack.c.bf16 %v540, %v540
        %v543 = vpack.c.bf16 %v541, %v541
        %v544 = vpack.c.bf16 %v525, %v525
        %v545 = vpack.c.bf16 %v526, %v526
        %v546 = vadd.s32 %v335, 4
        %v547 = vadd.s32 %v336, 4
        %vm548 = vcmp.ge.s32.totalorder %v546, 0
        %vm549 = vcmp.ge.s32.totalorder %v547, 0
        %vm550 = vcmp.lt.s32.totalorder %v546, 16
        %vm551 = vcmp.lt.s32.totalorder %v547, 16
        %vm552 = vmand %vm548, %vm550
        %vm553 = vmand %vm549, %vm551
        %v554 = vsel %vm552, %v530, 0.0
        %v555 = vsel %vm553, %v531, 0.0
        %v556 = vpack.c.bf16 %v554, %v554
        %v557 = vpack.c.bf16 %v555, %v555
        %v560 = vunpack.c.l.b16 %v542
        %v561 = vunpack.c.l.b16 %v543
        %v562 = vpack.c.b16 %v561, %v560
        %v565 = vunpack.c.l.b16 %v544
        %v566 = vunpack.c.l.b16 %v545
        %v567 = vpack.c.b16 %v566, %v565
        %568 = vrot.lane.b32.xlu0 %v567, 32
        %v569 = vpop.permute.xlu0 %568
        %v572 = vunpack.c.l.b16 %v556
        %v573 = vunpack.c.l.b16 %v557
        %v574 = vpack.c.b16 %v573, %v572
        %575 = vrot.lane.b32.xlu0 %v574, 64
        %v576 = vpop.permute.xlu0 %575
        %v579 = vsel %vm331, %v562, %v569
        %v581 = vsel %vm397, %v579, %v576
        %s582 = scalar_lea.vmem %s2, 48
        %v583 = vld [vmem:[%s582] sm:$0xf]
        %v584 = vld [vmem:[%s582 + $0x4] sm:$0xf]
        %v585 = vld [vmem:[%s582 + $0x8] sm:$0xf]
        %v586 = vld [vmem:[%s582 + $0xc] sm:$0xf]
        %v587 = vld [vmem:[%s582 + $0x10] sm:$0xf]
        %v588 = vld [vmem:[%s582 + $0x14] sm:$0xf]
        %v589 = vld [vmem:[%s582 + $0x18] sm:$0xf]
        %v590 = vld [vmem:[%s582 + $0x1c] sm:$0xf]
        %v591 = vld [vmem:[%s582 + $0x20] sm:$0xf]
        %v592 = vld [vmem:[%s582 + $0x24] sm:$0xf]
        %v593 = vld [vmem:[%s582 + $0x28] sm:$0xf]
        %v594 = vld [vmem:[%s582 + $0x2c] sm:$0xf]
        %s595 = scalar_lea.vmem %s3, 1
        %v596 = vld [vmem:[%s595] sm:$0x1]
        %v598 = vperm.slane %v596, 0
        %v612 = vunpack.c.l.b16 %v583
        %v613 = vunpack.c.l.b16 %v584
        %v614 = vunpack.c.l.b16 %v585
        %v615 = vunpack.c.l.b16 %v586
        %v616 = vunpack.c.l.b16 %v587
        %v617 = vunpack.c.l.b16 %v588
        %v618 = vunpack.c.l.b16 %v589
        %v619 = vunpack.c.l.b16 %v590
        %v620 = vunpack.c.l.b16 %v591
        %v621 = vunpack.c.l.b16 %v592
        %v622 = vunpack.c.l.b16 %v593
        %v623 = vunpack.c.l.b16 %v594
        %v624 = vpack.c.b16 %v613, %v612
        %v625 = vpack.c.b16 %v615, %v614
        %v626 = vpack.c.b16 %v617, %v616
        %v627 = vpack.c.b16 %v619, %v618
        %v628 = vpack.c.b16 %v621, %v620
        %v629 = vpack.c.b16 %v623, %v622
        %v636 = vsel %vm452, %v581, 0
        %638 = vmatpush.bf16.msra.mxu0 0
        %639 = vmatpush.bf16.msra.mxu0 0
        %640 = vmatpush.bf16.msra.mxu0 %v629
        %641 = vmatpush.bf16.msra.mxu0 %v628
        %642 = vmatpush.bf16.msra.mxu0 %v627
        %643 = vmatpush.bf16.msra.mxu0 %v626
        %644 = vmatpush.bf16.msra.mxu0 %v625
        %645 = vmatpush.bf16.msra.mxu0 %v624
        %646 = vmatmul.bf16.gmra.mxu0 %v636
        %v647 = vpop.f32.mrf.mxu0
        %v648 = vadd.f32 %v598, %v647
        %v649 = vpop.f32.mrf.mxu0
        %v650 = vadd.f32 %v598, %v649
        %651 = vdwg.mxu0
        %v652 = vmax.f32 %v648, 0.0
        %v653 = vmax.f32 %v650, 0.0
        %v654 = vpack.c.bf16 %v653, %v652
        %s655 = scalar_lea.vmem %s4, 16
        %v656 = vld [vmem:[%s655] sm:$0xf]
        %v657 = vld [vmem:[%s655 + $0x4] sm:$0xf]
        %v658 = vld [vmem:[%s655 + $0x8] sm:$0xf]
        %v659 = vld [vmem:[%s655 + $0xc] sm:$0xf]
        %s660 = scalar_lea.vmem %s5, 1
        %v661 = vld [vmem:[%s660] sm:$0x1]
        %v663 = vperm.slane %v661, 0
        %v669 = vunpack.c.l.b16 %v656
        %v670 = vunpack.c.l.b16 %v657
        %v671 = vunpack.c.l.b16 %v658
        %v672 = vunpack.c.l.b16 %v659
        %v673 = vpack.c.b16 %v670, %v669
        %v674 = vpack.c.b16 %v672, %v671
        %v678 = vsel %vm331, %v654, 0
        %680 = vmatpush.bf16.msra.mxu0 0
        %681 = vmatpush.bf16.msra.mxu0 0
        %682 = vmatpush.bf16.msra.mxu0 0
        %683 = vmatpush.bf16.msra.mxu0 0
        %684 = vmatpush.bf16.msra.mxu0 0
        %685 = vmatpush.bf16.msra.mxu0 0
        %686 = vmatpush.bf16.msra.mxu0 %v674
        %687 = vmatpush.bf16.msra.mxu0 %v673
        %688 = vmatmul.bf16.gmra.mxu0 %v678
        %v689 = vpop.f32.mrf.mxu0
        %v690 = vadd.f32 %v663, %v689
        %v691 = vpop.f32.mrf.mxu0
        %v692 = vadd.f32 %v663, %v691
        %693 = vdwg.mxu0
        %v694 = vadd.f32 %v525, %v690
        %v695 = vadd.f32 %v526, %v692
        %v696 = vmul.f32 %v694, %v514
        %v697 = vmul.f32 %v695, %v519
        %698 = vst.msk [vmem:[#allocation2] sm:$0xff] %vm331, %v696
        %699 = vst.msk [vmem:[#allocation2 + $0x8] sm:$0xff] %vm331, %v697
        %v700 = vld [vmem:[#allocation2] sm:$0xff]
        %v701 = vld [vmem:[#allocation2 + $0x8] sm:$0xff]
        %v702 = vpack.c.bf16 %v701, %v700
        %v703 = vld [vmem:[%s6] sm:$0xf]
        %v704 = vld [vmem:[%s6 + $0x4] sm:$0xf]
        %v705 = vld [vmem:[%s6 + $0x8] sm:$0xf]
        %v706 = vld [vmem:[%s6 + $0xc] sm:$0xf]
        %v707 = vld [vmem:[%s7] sm:$0x1]
        %v709 = vperm.slane %v707, 0
        %v715 = vunpack.c.l.b16 %v703
        %v716 = vunpack.c.l.b16 %v704
        %v717 = vunpack.c.l.b16 %v705
        %v718 = vunpack.c.l.b16 %v706
        %v719 = vpack.c.b16 %v716, %v715
        %v720 = vpack.c.b16 %v718, %v717
        %v724 = vsel %vm331, %v702, 0
        %726 = vmatpush.bf16.msra.mxu0 0
        %727 = vmatpush.bf16.msra.mxu0 0
        %728 = vmatpush.bf16.msra.mxu0 0
        %729 = vmatpush.bf16.msra.mxu0 0
        %730 = vmatpush.bf16.msra.mxu0 0
        %731 = vmatpush.bf16.msra.mxu0 0
        %732 = vmatpush.bf16.msra.mxu0 %v720
        %733 = vmatpush.bf16.msra.mxu0 %v719
        %734 = vmatmul.bf16.gmra.mxu0 %v724
        %v735 = vpop.f32.mrf.mxu0
        %v736 = vadd.f32 %v709, %v735
        %v737 = vpop.f32.mrf.mxu0
        %v738 = vadd.f32 %v709, %v737
        %739 = vdwg.mxu0
        %v740 = vmul.f32 %v736, %v514
        %v741 = vmul.f32 %v738, %v519
        %742 = vst [vmem:[%s313] sm:$0xff] %v740
        %743 = vst [vmem:[%s313 + $0x8] sm:$0xff] %v741
        %s744 = sand.u32 %s208, 1
        %s745 = scalar_lea.sflag [#allocation4], %s744
        %s746 = sand.u32 %s208, 1
        %s747 = smul.addr %s746, 16
        %s748 = scalar_lea.vmem [#allocation3], %s747
        // Predicated region
        $region53: #{tpu_custom_call.1} parent=51 // pred_check
          %p749 = pneg %p218
        $region54: #{tpu_custom_call.1} parent=51 // pred_check_branch
          %751 = sbr.rel (%p749) target = $region56
        $region55: #{tpu_custom_call.1} parent=51 // pred_region
          %753 = vsyncadd %s745, 0
          %s754 = smul.addr %s22, 2
          %s755 = smul.addr %s754, 8
          %s756 = scalar_lea.hbm %s8, %s755
          %s757 = sshll.u32 %s748, 4
          %s758 = int_to_ptr.vmem [resolvable:$true] %s757
          %s759 = sshll.u32 %s756, 4
          %s760 = int_to_ptr.hbm [resolvable:$true] %s759
          %765 = dma.vmem_to_hbm [thread:$0]  %s758, 256, %s760, %s745, 128, 128, 8
        $region56: #{tpu_custom_call.1} parent=51 // pred_fallthru
          _
      $region52: #{tpu_custom_call.1} parent=5 // pred_fallthru
        _
      %p766 = scmp.le.s32.totalorder 2, %s17
      // Predicated region
      $region57: #{tpu_custom_call.1} parent=5 // pred_check
        %p767 = pneg %p766
      $region58: #{tpu_custom_call.1} parent=5 // pred_check_branch
        %769 = sbr.rel (%p767) target = $region60
      $region59: #{tpu_custom_call.1} parent=5 // pred_region
        %s770 = ssub.s32 %s17, 2
        // Predicated region
        $region61: #{tpu_custom_call.1} parent=59 // pred_check
          %p771 = pneg %p224
        $region62: #{tpu_custom_call.1} parent=59 // pred_check_branch
          %773 = sbr.rel (%p771) target = $region64
        $region63: #{tpu_custom_call.1} parent=59 // pred_region
          %s774 = sand.u32 %s209, 1
          %s775 = scalar_lea.sflag [#allocation4], %s774
          %s776 = sand.u32 %s209, 1
          %s777 = smul.addr %s776, 16
          %s778 = scalar_lea.vmem [#allocation3], %s777
          %780 = dma.done %s775, 256
        $region64: #{tpu_custom_call.1} parent=59 // pred_fallthru
          _
      $region60: #{tpu_custom_call.1} parent=5 // pred_fallthru
        _
    $region6: #{tpu_custom_call.1} parent=1 // loop_footer
      %s21 = sadd.s32 1, %s17
    $region7: #{tpu_custom_call.1} parent=1 // loop_footer_branch
      %16 = sbr.rel target = $region3
    $region8: #{tpu_custom_call.1} parent=1 // loop_exit
      _
    %781 = vsyncpa [#allocation4], 1
    %s782 = scalar_lea.sflag [#allocation4], 1
    %783 = vsyncpa %s782, 1

</llo_original>
